<compile_context>
chip_gen: v6e
topology: v6e:2x2x1
jax: 0.10.0
libtpu: 0.0.40
codegen_flags: <defaults>
</compile_context>

<pallas_src>
import jax
import jax.numpy as jnp
from jax import lax
from jax.experimental import pallas as pl
from jax.experimental.pallas import tpu as pltpu


# ----------------------------------------------------------------------------
# Kernels
# ----------------------------------------------------------------------------
def _attn_kernel(x_ref, a_ref, wk_ref, bk_ref, attn_ref):
    """Phase A: accumulate energy over HW tiles, softmax on the last tile.

    x_ref    : (tile, C)    input feature tile (channels-last)
    a_ref    : (tile, C8)   attention-branch feature tile
    attn_ref : (C8, C8)     f32 output block, resident across the HW axis
    """
    t = pl.program_id(1)

    @pl.when(t == 0)
    def _init():
        attn_ref[...] = jnp.zeros_like(attn_ref)

    x = x_ref[...]
    a = a_ref[...]

    # key_conv (1x1) for this HW tile; MXU inputs stay in the operand dtype
    # (bf16 fast path), accumulation in f32.
    key = (jnp.dot(x, wk_ref[...], preferred_element_type=jnp.float32)
           + bk_ref[...].astype(jnp.float32)).astype(x.dtype)

    # energy[c, c'] += sum_p key[p, c] * att[p, c']   (contraction over HW tile;
    # per-tile the operand transpose through the XLU is cheap).
    attn_ref[...] += lax.dot_general(key, a, (((0,), (0,)), ((), ())),
                                     preferred_element_type=jnp.float32)

    @pl.when(t == pl.num_programs(1) - 1)
    def _softmax():
        e = attn_ref[...]
        e = e - jnp.max(e, axis=-1, keepdims=True)
        p = jnp.exp(e)
        attn_ref[...] = p / jnp.sum(p, axis=-1, keepdims=True)


def _out_kernel(a_ref, x_ref, attn_ref, w1_ref, b1_ref,
                w2a_ref, w2b_ref, b2_ref, o_ref):
    """Phase B: per-HW-tile output.

    a_ref    : (tile, C8)   att tile
    x_ref    : (tile, C)    x tile
    attn_ref : (C8, C8)     f32 attention matrix for this batch element
    o_ref    : (tile, C)    output tile (lane-dense: last dim = C)
    """
    a = a_ref[...]
    x = x_ref[...]
    attn = attn_ref[...].astype(a.dtype)          # tiny (C8, C8) cast

    # out1[p, c] = sum_c' attn[c, c'] * att[p, c']
    out1 = lax.dot_general(a, attn, (((1,), (1,)), ((), ())),
                           preferred_element_type=jnp.float32)

    # conv1x1_1 + BN (folded) + ReLU
    y1 = (jnp.dot(out1.astype(w1_ref.dtype), w1_ref[...],
                  preferred_element_type=jnp.float32)
          + b1_ref[...].astype(jnp.float32))
    y1 = jnp.maximum(y1, 0.0)

    # cat((out, x), channel) -> conv1x1_2 + BN (folded) + ReLU,
    # with the concat folded into two matmuls (w2a for out, w2b for x).
    y2 = (jnp.dot(y1.astype(w2a_ref.dtype), w2a_ref[...],
                  preferred_element_type=jnp.float32)
          + jnp.dot(x, w2b_ref[...], preferred_element_type=jnp.float32)
          + b2_ref[...].astype(jnp.float32))
    o_ref[...] = jnp.maximum(y2, 0.0).astype(o_ref.dtype)


# ----------------------------------------------------------------------------
# Wrappers
# ----------------------------------------------------------------------------
# Default HW-tile candidates.  512 keeps the phase-B working set well inside
# v7x's 64 MiB VMEM (32 MiB scoped default); on v5e/v6e (128 MiB) passing
# hw_tile=1024 or 2048 amortizes per-grid-step overhead further.
_DEFAULT_TILE_CANDIDATES = (512, 256, 128, 64, 32, 16, 8)


def _pick_hw_tile(hw, requested=None):
    if requested is not None and hw % requested == 0 and (
            requested == hw or requested % 8 == 0):
        return requested
    for t in _DEFAULT_TILE_CANDIDATES:
        if t <= hw and hw % t == 0:
            return t
    return hw  # full extent (exempt from the (8,128) rule)


def cca_forward_flat(x_flat, att_flat, p, hw_tile=None):
    """Channels-last entry point: x_flat (B, HW, C), att_flat (B, HW, C8)."""
    B, HW, C = x_flat.shape
    C8 = att_flat.shape[-1]
    tile = _pick_hw_tile(HW, hw_tile)
    n_t = HW // tile

    wk, bk = p["wk"], p["bk"]
    w1, b1 = p["w1"], p["b1"]
    w2a, w2b, b2 = p["w2a"], p["w2b"], p["b2"]

    def full2(arr):  # full-array block, resident across the grid
        return pl.BlockSpec(arr.shape, lambda b, t: (0,) * arr.ndim)

    # ---- Phase A: attention = softmax(energy), shape (B, C8, C8) in f32 ----
    attn = pl.pallas_call(
        _attn_kernel,
        out_shape=jax.ShapeDtypeStruct((B, C8, C8), jnp.float32),
        grid_spec=pltpu.PrefetchScalarGridSpec(
            num_scalar_prefetch=0,
            grid=(B, n_t),
            in_specs=[
                pl.BlockSpec((None, tile, C), lambda b, t: (b, t, 0)),   # x
                pl.BlockSpec((None, tile, C8), lambda b, t: (b, t, 0)),  # att
                full2(wk), full2(bk),
            ],
            out_specs=pl.BlockSpec((None, C8, C8), lambda b, t: (b, 0, 0)),
        ),
        compiler_params=pltpu.CompilerParams(
            dimension_semantics=("parallel", "arbitrary")),
    )(x_flat, att_flat, wk, bk)

    # ---- Phase B: per-tile output, shape (B, HW, C) ----
    out_flat = pl.pallas_call(
        _out_kernel,
        out_shape=jax.ShapeDtypeStruct((B, HW, C), x_flat.dtype),
        grid_spec=pltpu.PrefetchScalarGridSpec(
            num_scalar_prefetch=0,
            grid=(B, n_t),
            in_specs=[
                pl.BlockSpec((None, tile, C8), lambda b, t: (b, t, 0)),  # att
                pl.BlockSpec((None, tile, C), lambda b, t: (b, t, 0)),   # x
                pl.BlockSpec((None, C8, C8), lambda b, t: (b, 0, 0)),    # attn
                full2(w1), full2(b1), full2(w2a), full2(w2b), full2(b2),
            ],
            out_specs=pl.BlockSpec((None, tile, C), lambda b, t: (b, t, 0)),
        ),
        compiler_params=pltpu.CompilerParams(
            dimension_semantics=("parallel", "parallel")),
    )(att_flat, x_flat, attn, w1, b1, w2a, w2b, b2)

    return out_flat


def cca_forward_pallas(x_nchw, att_nchw, kparams, hw_tile=None):
    """NCHW entry point matching the PyTorch module interface.

    NOTE: the NCHW<->channels-last transposes below are full HBM round trips;
    in an end-to-end NHWC model call cca_forward_flat directly instead.
    """
    B, C, H, W = x_nchw.shape
    C8 = att_nchw.shape[1]
    HW = H * W

    x_flat = jnp.transpose(x_nchw, (0, 2, 3, 1)).reshape(B, HW, C)
    att_flat = jnp.transpose(att_nchw, (0, 2, 3, 1)).reshape(B, HW, C8)

    out_flat = cca_forward_flat(x_flat, att_flat, kparams, hw_tile=hw_tile)
    return jnp.transpose(out_flat.reshape(B, H, W, C), (0, 3, 1, 2))


# ----------------------------------------------------------------------------
# Parameters & reference
# ----------------------------------------------------------------------------
def make_params(C, eps=1e-5):
    """Deterministic synthetic parameters (no checkpoint loading).

    Returns (kernel_params, raw_params): kernel_params has BatchNorm folded
    into the conv weights/biases (eval mode) and w2 split for the concat fold;
    raw_params mirrors the PyTorch module for the pure-JAX reference.
    """
    C8 = C // 8
    ks = jax.random.split(jax.random.PRNGKey(0), 6)

    # key_conv : Conv2d(C -> C8, 1x1); stored channels-last (Cin, Cout)
    wk = jax.random.normal(ks[0], (C, C8), jnp.float32) * 0.1
    bk = jax.random.normal(ks[1], (1, C8), jnp.float32) * 0.1
    # conv1x1_1 : Conv2d(C8 -> C8, 1x1) + BN(C8) + ReLU
    w1 = jax.random.normal(ks[2], (C8, C8), jnp.float32) * 0.1
    b1 = jax.random.normal(ks[3], (1, C8), jnp.float32) * 0.1
    # conv1x1_2 : Conv2d(C8 + C -> C, 1x1) + BN(C) + ReLU
    w2 = jax.random.normal(ks[4], (C8 + C, C), jnp.float32) * 0.1
    b2 = jax.random.normal(ks[5], (1, C), jnp.float32) * 0.1

    # BatchNorm eval-mode parameters (PyTorch defaults).
    # TODO(synk): BatchNorm uses eval-mode running stats; training-mode batch
    # statistics are not reproduced.
    s1 = jnp.ones((1, C8)) / jnp.sqrt(jnp.ones((1, C8)) + eps)
    t1 = jnp.zeros((1, C8)) - jnp.zeros((1, C8)) * s1
    s2 = jnp.ones((1, C)) / jnp.sqrt(jnp.ones((1, C)) + eps)
    t2 = jnp.zeros((1, C)) - jnp.zeros((1, C)) * s2

    raw = dict(wk=wk, bk=bk, w1=w1, b1=b1, s1=s1, t1=t1,
               w2=w2, b2=b2, s2=s2, t2=t2)

    # Fold BN into the conv weights/biases; split w2 for cat((out, x)).
    w1f, b1f = w1 * s1, b1 * s1 + t1
    w2f, b2f = w2 * s2, b2 * s2 + t2
    kern = dict(wk=wk, bk=bk, w1=w1f, b1=b1f,
                w2a=w2f[:C8], w2b=w2f[C8:], b2=b2f)
    return kern, raw


def cast_matmul_weights(kparams, dtype):
    """Cast the MXU weight matrices; biases stay f32 (added post-matmul)."""
    out = dict(kparams)
    for name in ("wk", "w1", "w2a", "w2b"):
        out[name] = kparams[name].astype(dtype)
    return out


def reference_forward(x, att, raw):
    """Pure-JAX NCHW reference mirroring the PyTorch forward exactly."""
    wk, bk = raw["wk"], raw["bk"]
    w1, b1, s1, t1 = raw["w1"], raw["b1"], raw["s1"], raw["t1"]
    w2, b2, s2, t2 = raw["w2"], raw["b2"], raw["s2"], raw["t2"]
    B, C, H, W = x.shape
    C8 = C // 8
    HW = H * W

    proj_query = jnp.transpose(att.reshape(B, C8, HW), (0, 2, 1))
    key = jnp.einsum('bchw,co->bohw', x, wk) + bk.reshape(1, C8, 1, 1)
    proj_key = key.reshape(B, C8, HW)
    energy = jnp.einsum('bcp,bpd->bcd', proj_key, proj_query)
    attention = jax.nn.softmax(energy, axis=-1)
    proj_value = att.reshape(B, C8, HW)
    out = jnp.einsum('bcd,bdp->bcp', attention, proj_value).reshape(B, C8, H, W)

    out = jnp.einsum('bchw,co->bohw', out, w1) + b1.reshape(1, C8, 1, 1)
    out = jnp.maximum(out * s1.reshape(1, C8, 1, 1) + t1.reshape(1, C8, 1, 1), 0.0)

    cat = jnp.concatenate([out, x], axis=1)
    out = jnp.einsum('bchw,co->bohw', cat, w2) + b2.reshape(1, C, 1, 1)
    out = jnp.maximum(out * s2.reshape(1, C, 1, 1) + t2.reshape(1, C, 1, 1), 0.0)
    return out


if __name__ == "__main__":
    B, C, H, W = 2, 32, 16, 16      # C must be divisible by 8
    C8 = C // 8

    kx, ka = jax.random.split(jax.random.PRNGKey(0), 2)
    x = jax.random.normal(kx, (B, C, H, W), jnp.float32)
    att = jax.random.normal(ka, (B, C8, H, W), jnp.float32)

    kparams, raw = make_params(C)
    ref = reference_forward(x, att, raw)

    # f32 run (tight check); hw_tile=64 exercises the tiled energy accumulation.
    out_f32 = jax.block_until_ready(cca_forward_pallas(x, att, kparams, hw_tile=64))
    assert out_f32.shape == (B, C, H, W)
    assert jnp.allclose(out_f32, ref, rtol=1e-3, atol=1e-3), "f32 mismatch vs reference"

    # bf16 fast path (bf16 MXU matmuls + halved HBM traffic, f32 accumulation
    # and softmax); loose max-normalized check vs the f32 reference.
    out_bf16 = jax.block_until_ready(
        cca_forward_pallas(x.astype(jnp.bfloat16), att.astype(jnp.bfloat16),
                           cast_matmul_weights(kparams, jnp.bfloat16),
                           hw_tile=64))
    err = (jnp.max(jnp.abs(out_bf16.astype(jnp.float32) - ref))
           / (jnp.max(jnp.abs(ref)) + 1e-6))
    assert bool(jnp.isfinite(err)) and float(err) < 0.1, f"bf16 mismatch: {err}"

    print("KERNEL_OK")
</pallas_src>

<mosaic_0001>
module attributes {stable_mosaic.version = 11 : i64} {
  func.func @_attn_kernel(%arg0: i32, %arg1: i32, %arg2: memref<1x64x32xf32, #tpu.memory_space<vmem>>, %arg3: memref<1x64x4xf32, #tpu.memory_space<vmem>>, %arg4: memref<32x4xf32, #tpu.memory_space<vmem>>, %arg5: memref<1x4xf32, #tpu.memory_space<vmem>>, %arg6: memref<1x4x4xf32, #tpu.memory_space<vmem>>) attributes {dimension_semantics = [#tpu.dimension_semantics<parallel>, #tpu.dimension_semantics<arbitrary>], iteration_bounds = array<i64: 2, 4>, scalar_prefetch = 0 : i64, scratch_operands = 0 : i64, tpu.core_type = #tpu.core_type<tc>, window_params = [{transform_indices = @transform_0, window_bounds = array<i64: 1, 64, 32>}, {transform_indices = @transform_1, window_bounds = array<i64: 1, 64, 4>}, {pipeline_mode = #tpu.pipeline_mode<synchronous>, transform_indices = @transform_2, window_bounds = array<i64: 32, 4>}, {pipeline_mode = #tpu.pipeline_mode<synchronous>, transform_indices = @transform_3, window_bounds = array<i64: 1, 4>}, {transform_indices = @transform_4, window_bounds = array<i64: 1, 4, 4>}]} {
    %c0_i32 = arith.constant 0 : i32
    %0 = arith.cmpi eq, %arg1, %c0_i32 : i32
    %1 = arith.extui %0 : i1 to i32
    %c0_i32_0 = arith.constant 0 : i32
    %2 = arith.cmpi ne, %1, %c0_i32_0 : i32
    scf.if %2 {
      %cst_18 = arith.constant 0.000000e+00 : f32
      %22 = vector.broadcast %cst_18 : f32 to vector<4x4xf32>
      %c0_19 = arith.constant 0 : index
      %c0_20 = arith.constant 0 : index
      %c0_21 = arith.constant 0 : index
      %23 = vector.load %arg6[%c0_19, %c0_20, %c0_21] : memref<1x4x4xf32, #tpu.memory_space<vmem>>, vector<1x4x4xf32>
      %24 = vector.shape_cast %23 : vector<1x4x4xf32> to vector<4x4xf32>
      %25 = vector.shape_cast %22 : vector<4x4xf32> to vector<1x4x4xf32>
      tpu.vector_store %arg6[%c0_19, %c0_20, %c0_21], %25 {strides = array<i32>} : memref<1x4x4xf32, #tpu.memory_space<vmem>>, vector<1x4x4xf32>,
    } else {
    }
    %c0 = arith.constant 0 : index
    %c0_1 = arith.constant 0 : index
    %c0_2 = arith.constant 0 : index
    %3 = vector.load %arg2[%c0, %c0_1, %c0_2] : memref<1x64x32xf32, #tpu.memory_space<vmem>>, vector<1x64x32xf32>
    %4 = vector.shape_cast %3 : vector<1x64x32xf32> to vector<64x32xf32>
    %c0_3 = arith.constant 0 : index
    %c0_4 = arith.constant 0 : index
    %c0_5 = arith.constant 0 : index
    %5 = vector.load %arg3[%c0_3, %c0_4, %c0_5] : memref<1x64x4xf32, #tpu.memory_space<vmem>>, vector<1x64x4xf32>
    %6 = vector.shape_cast %5 : vector<1x64x4xf32> to vector<64x4xf32>
    %c0_6 = arith.constant 0 : index
    %c0_7 = arith.constant 0 : index
    %7 = vector.load %arg4[%c0_6, %c0_7] : memref<32x4xf32, #tpu.memory_space<vmem>>, vector<32x4xf32>
    %cst = arith.constant dense<0.000000e+00> : vector<64x4xf32>
    %8 = tpu.matmul %4, %7, %cst {dimension_numbers = #tpu.dot_dimension_numbers<[1], [0], [0], [1], [0, 0, 1, 1], [], []>} : vector<64x32xf32>, vector<32x4xf32>, vector<64x4xf32> -> vector<64x4xf32>
    %c0_8 = arith.constant 0 : index
    %c0_9 = arith.constant 0 : index
    %9 = vector.load %arg5[%c0_8, %c0_9] : memref<1x4xf32, #tpu.memory_space<vmem>>, vector<1x4xf32>
    %10 = vector.broadcast %9 : vector<1x4xf32> to vector<64x4xf32>
    %11 = arith.addf %8, %10 : vector<64x4xf32>
    %c0_10 = arith.constant 0 : index
    %c0_11 = arith.constant 0 : index
    %c0_12 = arith.constant 0 : index
    %12 = vector.load %arg6[%c0_10, %c0_11, %c0_12] : memref<1x4x4xf32, #tpu.memory_space<vmem>>, vector<1x4x4xf32>
    %13 = vector.shape_cast %12 : vector<1x4x4xf32> to vector<4x4xf32>
    %cst_13 = arith.constant dense<0.000000e+00> : vector<4x4xf32>
    %14 = tpu.matmul %11, %6, %cst_13 {dimension_numbers = #tpu.dot_dimension_numbers<[0], [0], [1], [1], [0, 1, 1, 1], [], []>} : vector<64x4xf32>, vector<64x4xf32>, vector<4x4xf32> -> vector<4x4xf32>
    %15 = arith.addf %13, %14 : vector<4x4xf32>
    %c0_14 = arith.constant 0 : index
    %c0_15 = arith.constant 0 : index
    %c0_16 = arith.constant 0 : index
    %16 = vector.load %arg6[%c0_14, %c0_15, %c0_16] : memref<1x4x4xf32, #tpu.memory_space<vmem>>, vector<1x4x4xf32>
    %17 = vector.shape_cast %16 : vector<1x4x4xf32> to vector<4x4xf32>
    %18 = vector.shape_cast %15 : vector<4x4xf32> to vector<1x4x4xf32>
    tpu.vector_store %arg6[%c0_14, %c0_15, %c0_16], %18 {strides = array<i32>} : memref<1x4x4xf32, #tpu.memory_space<vmem>>, vector<1x4x4xf32>,
    %c3_i32 = arith.constant 3 : i32
    %19 = arith.cmpi eq, %arg1, %c3_i32 : i32
    %20 = arith.extui %19 : i1 to i32
    %c0_i32_17 = arith.constant 0 : i32
    %21 = arith.cmpi ne, %20, %c0_i32_17 : i32
    scf.if %21 {
      %c0_18 = arith.constant 0 : index
      %c0_19 = arith.constant 0 : index
      %c0_20 = arith.constant 0 : index
      %22 = vector.load %arg6[%c0_18, %c0_19, %c0_20] : memref<1x4x4xf32, #tpu.memory_space<vmem>>, vector<1x4x4xf32>
      %23 = vector.shape_cast %22 : vector<1x4x4xf32> to vector<4x4xf32>
      %cst_21 = arith.constant dense<0xFF800000> : vector<4xf32>
      %24 = vector.multi_reduction <maximumf>, %23, %cst_21 [1] : vector<4x4xf32> to vector<4xf32>
      %25 = vector.shape_cast %24 : vector<4xf32> to vector<4x1xf32>
      %26 = vector.broadcast %25 : vector<4x1xf32> to vector<4x4xf32>
      %27 = arith.subf %23, %26 : vector<4x4xf32>
      %28 = math.exp %27 : vector<4x4xf32>
      %cst_22 = arith.constant dense<0.000000e+00> : vector<4xf32>
      %29 = vector.multi_reduction <add>, %28, %cst_22 [1] : vector<4x4xf32> to vector<4xf32>
      %30 = vector.shape_cast %29 : vector<4xf32> to vector<4x1xf32>
      %31 = vector.broadcast %30 : vector<4x1xf32> to vector<4x4xf32>
      %32 = arith.divf %28, %31 : vector<4x4xf32>
      %c0_23 = arith.constant 0 : index
      %c0_24 = arith.constant 0 : index
      %c0_25 = arith.constant 0 : index
      %33 = vector.load %arg6[%c0_23, %c0_24, %c0_25] : memref<1x4x4xf32, #tpu.memory_space<vmem>>, vector<1x4x4xf32>
      %34 = vector.shape_cast %33 : vector<1x4x4xf32> to vector<4x4xf32>
      %35 = vector.shape_cast %32 : vector<4x4xf32> to vector<1x4x4xf32>
      tpu.vector_store %arg6[%c0_23, %c0_24, %c0_25], %35 {strides = array<i32>} : memref<1x4x4xf32, #tpu.memory_space<vmem>>, vector<1x4x4xf32>,
    } else {
    }
    return
  }
  func.func @transform_0(%arg0: i32, %arg1: i32) -> (i32, i32, i32) {
    %c0_i32 = arith.constant 0 : i32
    %c0_i32_0 = arith.constant 0 : i32
    return %arg0, %arg1, %c0_i32 : i32, i32, i32
  }
  func.func @transform_1(%arg0: i32, %arg1: i32) -> (i32, i32, i32) {
    %c0_i32 = arith.constant 0 : i32
    %c0_i32_0 = arith.constant 0 : i32
    return %arg0, %arg1, %c0_i32 : i32, i32, i32
  }
  func.func @transform_2(%arg0: i32, %arg1: i32) -> (i32, i32) {
    %c0_i32 = arith.constant 0 : i32
    %c0_i32_0 = arith.constant 0 : i32
    %c0_i32_1 = arith.constant 0 : i32
    return %c0_i32, %c0_i32_0 : i32, i32
  }
  func.func @transform_3(%arg0: i32, %arg1: i32) -> (i32, i32) {
    %c0_i32 = arith.constant 0 : i32
    %c0_i32_0 = arith.constant 0 : i32
    %c0_i32_1 = arith.constant 0 : i32
    return %c0_i32, %c0_i32_0 : i32, i32
  }
  func.func @transform_4(%arg0: i32, %arg1: i32) -> (i32, i32, i32) {
    %c0_i32 = arith.constant 0 : i32
    %c0_i32_0 = arith.constant 0 : i32
    %c0_i32_1 = arith.constant 0 : i32
    return %arg0, %c0_i32, %c0_i32_0 : i32, i32, i32
  }
}

</mosaic_0001>

<llo_original>
// kernel: tpu_custom_call.1
$region0: #{tpu_custom_call.1}
  #allocation0 [shape = 'u32[]', space=smem, size = 0x4, offset = 0x4, fixed_abs, tag = 'smem constant byte address 0x4 - core index']
  #allocation1 [shape = 'u32[144,128]{1,0:T(1,128)}', space=vmem, size = 0x12000, scoped, tag = 'internal scratch']
  %s0 = inlined_call_operand.vmem [shape: f32[2,256,32], index: 0, kind: input, shape index: {}]
  %s1 = inlined_call_operand.vmem [shape: f32[2,256,4], index: 1, kind: input, shape index: {}]
  %s2 = inlined_call_operand.vmem [shape: f32[32,4], index: 2, kind: input, shape index: {}]
  %s3 = inlined_call_operand.vmem [shape: f32[1,4], index: 3, kind: input, shape index: {}]
  %s4 = inlined_call_operand.hbm [shape: f32[2,4,4], index: 4, kind: output, shape index: {}]
  %s5 = sld [smem:[#allocation0]]
  $region57: #{tpu_custom_call.1} parent=0
    _
  %s7 = ssub.s32 1, %s5
  %s8 = scalar_select 0, %s7, %s5
  $region1: #{tpu_custom_call.1} parent=0
    #allocation2 [shape = 'u8[4096]{0}', space=vmem, size = 0x1000, scoped, tag = 'output window, operand 0']
    #allocation3 [shape = 's32[2]{0}', space=sflag, size = 0x8, scoped, tag = 'scoped memory for tpu_custom_call.1']
    %9 = vsyncpa [#allocation3], 0
    %s10 = scalar_lea.sflag [#allocation3], 1
    %11 = vsyncpa %s10, 0
    loop: start=0, step=1, limit=10
    $region2: #{tpu_custom_call.1} parent=1 // loop_pre_header
      _
    $region3: #{tpu_custom_call.1} parent=1 // loop_header
      %s13 = sphi 0, %s17
      %p14 = scmp.ge.s32.totalorder %s13, 10
      %s20 = sphi 0, %s32
      %s21 = sphi 0, %s28
      %s22 = sphi 0, %s20
      %s23 = sphi 0, %s21
      %s24 = sphi 0, %s22
      %s25 = sphi 0, %s23
      %s37 = sphi 0, %s39
      %s40 = sphi 0, %s37
      %s41 = sphi 0, %s40
      %s57 = sphi 0, %s41
      %s65 = sphi 0, %s67
      %s68 = sphi 0, %s65
      %s69 = sphi 0, %s68
      %s85 = sphi 0, %s69
      %s89 = sphi 0, %s89
      %s91 = sphi 0, %s89
      %s92 = sphi 0, %s91
      %s106 = sphi 0, %s92
      %s110 = sphi 0, %s110
      %s112 = sphi 0, %s110
      %s113 = sphi 0, %s112
      %s127 = sphi 0, %s113
      %s133 = sphi 0, %s135
      %s136 = sphi 0, %s133
      %s137 = sphi 0, %s136
      %s153 = sphi 0, %s137
    $region4: #{tpu_custom_call.1} parent=1 // loop_header_branch
      %16 = sbr.rel (%p14) target = $region8
    $region5: #{tpu_custom_call.1} parent=1 // loop_body
      %s18 = ssub.s32 %s13, 1
      %s19 = ssub.s32 %s13, 2
      %s26 = sadd.s32 1, %s21
      %p27 = scmp.ge.s32.totalorder %s26, 4
      %s28 = scalar_select %p27, 0, %s26
      %s29 = sadd.s32 1, %s20
      %s30 = scalar_select %p27, %s29, %s20
      %p31 = scmp.ge.s32.totalorder %s30, 2
      %s32 = scalar_select %p31, 0, %s30
      %s33 = ssub.s32 %s20, %s32
      %s34 = ssub.s32 %s21, %s28
      %s35 = sor.u32 %s33, %s34
      %p36 = scmp.eq.s32.totalorder %s35, 0
      %s38 = sadd.s32 %s37, 1
      %s39 = scalar_select %p36, %s37, %s38
      %p42 = pneg %p36
      %p43 = scmp.eq.s32.totalorder %s13, 7
      %p44 = por %p42, %p43
      %p45 = scmp.ne.s32.totalorder %s37, %s40
      %p46 = scmp.eq.s32.totalorder %s13, 0
      %p47 = por %p45, %p46
      %p48 = scmp.ne.s32.totalorder %s37, %s40
      %p49 = scmp.eq.s32.totalorder %s18, 7
      %p50 = por %p48, %p49
      %p51 = scmp.ne.s32.totalorder %s40, %s41
      %p52 = scmp.eq.s32.totalorder %s18, 0
      %p53 = por %p51, %p52
      %p54 = scmp.ne.s32.totalorder %s40, %s41
      %p55 = scmp.eq.s32.totalorder %s19, 7
      %p56 = por %p54, %p55
      %p58 = scmp.ne.s32.totalorder %s41, %s57
      %p59 = scmp.eq.s32.totalorder %s19, 0
      %p60 = por %p58, %p59
      %s61 = ssub.s32 %s20, %s32
      %s62 = ssub.s32 %s21, %s28
      %s63 = sor.u32 %s61, %s62
      %p64 = scmp.eq.s32.totalorder %s63, 0
      %s66 = sadd.s32 %s65, 1
      %s67 = scalar_select %p64, %s65, %s66
      %p70 = pneg %p64
      %p71 = scmp.eq.s32.totalorder %s13, 7
      %p72 = por %p70, %p71
      %p73 = scmp.ne.s32.totalorder %s65, %s68
      %p74 = scmp.eq.s32.totalorder %s13, 0
      %p75 = por %p73, %p74
      %p76 = scmp.ne.s32.totalorder %s65, %s68
      %p77 = scmp.eq.s32.totalorder %s18, 7
      %p78 = por %p76, %p77
      %p79 = scmp.ne.s32.totalorder %s68, %s69
      %p80 = scmp.eq.s32.totalorder %s18, 0
      %p81 = por %p79, %p80
      %p82 = scmp.ne.s32.totalorder %s68, %s69
      %p83 = scmp.eq.s32.totalorder %s19, 7
      %p84 = por %p82, %p83
      %p86 = scmp.ne.s32.totalorder %s69, %s85
      %p87 = scmp.eq.s32.totalorder %s19, 0
      %p88 = por %p86, %p87
      %s90 = sadd.s32 %s89, 1
      %p93 = scmp.eq.s32.totalorder %s13, 7
      %p94 = scmp.ne.s32.totalorder %s89, %s91
      %p95 = scmp.eq.s32.totalorder %s13, 0
      %p96 = por %p94, %p95
      %p97 = scmp.ne.s32.totalorder %s89, %s91
      %p98 = scmp.eq.s32.totalorder %s18, 7
      %p99 = por %p97, %p98
      %p100 = scmp.ne.s32.totalorder %s91, %s92
      %p101 = scmp.eq.s32.totalorder %s18, 0
      %p102 = por %p100, %p101
      %p103 = scmp.ne.s32.totalorder %s91, %s92
      %p104 = scmp.eq.s32.totalorder %s19, 7
      %p105 = por %p103, %p104
      %p107 = scmp.ne.s32.totalorder %s92, %s106
      %p108 = scmp.eq.s32.totalorder %s19, 0
      %p109 = por %p107, %p108
      %s111 = sadd.s32 %s110, 1
      %p114 = scmp.eq.s32.totalorder %s13, 7
      %p115 = scmp.ne.s32.totalorder %s110, %s112
      %p116 = scmp.eq.s32.totalorder %s13, 0
      %p117 = por %p115, %p116
      %p118 = scmp.ne.s32.totalorder %s110, %s112
      %p119 = scmp.eq.s32.totalorder %s18, 7
      %p120 = por %p118, %p119
      %p121 = scmp.ne.s32.totalorder %s112, %s113
      %p122 = scmp.eq.s32.totalorder %s18, 0
      %p123 = por %p121, %p122
      %p124 = scmp.ne.s32.totalorder %s112, %s113
      %p125 = scmp.eq.s32.totalorder %s19, 7
      %p126 = por %p124, %p125
      %p128 = scmp.ne.s32.totalorder %s113, %s127
      %p129 = scmp.eq.s32.totalorder %s19, 0
      %p130 = por %p128, %p129
      %s131 = ssub.s32 %s20, %s32
      %p132 = scmp.eq.s32.totalorder %s131, 0
      %s134 = sadd.s32 %s133, 1
      %s135 = scalar_select %p132, %s133, %s134
      %p138 = pneg %p132
      %p139 = scmp.eq.s32.totalorder %s13, 7
      %p140 = por %p138, %p139
      %p141 = scmp.ne.s32.totalorder %s133, %s136
      %p142 = scmp.eq.s32.totalorder %s13, 0
      %p143 = por %p141, %p142
      %p144 = scmp.ne.s32.totalorder %s133, %s136
      %p145 = scmp.eq.s32.totalorder %s18, 7
      %p146 = por %p144, %p145
      %p147 = scmp.ne.s32.totalorder %s136, %s137
      %p148 = scmp.eq.s32.totalorder %s18, 0
      %p149 = por %p147, %p148
      %p150 = scmp.ne.s32.totalorder %s136, %s137
      %p151 = scmp.eq.s32.totalorder %s19, 7
      %p152 = por %p150, %p151
      %p154 = scmp.ne.s32.totalorder %s137, %s153
      %p155 = scmp.eq.s32.totalorder %s19, 0
      %p156 = por %p154, %p155
      %p157 = scmp.le.s32.totalorder 1, %s13
      %p158 = scmp.lt.s32.totalorder %s13, 9
      %p159 = pnand %p157, %p158
      %p160 = pneg %p159
      // Predicated region
      $region9: #{tpu_custom_call.1} parent=5 // pred_check
        _
      $region10: #{tpu_custom_call.1} parent=5 // pred_check_branch
        %162 = sbr.rel (%p159) target = $region12
      $region11: #{tpu_custom_call.1} parent=5 // pred_region
        %s163 = ssub.s32 %s13, 1
        // Predicated region
        $region13: #{tpu_custom_call.1} parent=11 // pred_check
          %p164 = pneg %p102
        $region14: #{tpu_custom_call.1} parent=11 // pred_check_branch
          %166 = sbr.rel (%p164) target = $region16
        $region15: #{tpu_custom_call.1} parent=11 // pred_region
          _
        $region16: #{tpu_custom_call.1} parent=11 // pred_fallthru
          _
        // Predicated region
        $region17: #{tpu_custom_call.1} parent=11 // pred_check
          %p167 = pneg %p123
        $region18: #{tpu_custom_call.1} parent=11 // pred_check_branch
          %169 = sbr.rel (%p167) target = $region20
        $region19: #{tpu_custom_call.1} parent=11 // pred_region
          _
        $region20: #{tpu_custom_call.1} parent=11 // pred_fallthru
          _
      $region12: #{tpu_custom_call.1} parent=5 // pred_fallthru
        _
      %p170 = scmp.lt.s32.totalorder %s13, 8
      // Predicated region
      $region21: #{tpu_custom_call.1} parent=5 // pred_check
        %p171 = pneg %p170
      $region22: #{tpu_custom_call.1} parent=5 // pred_check_branch
        %173 = sbr.rel (%p171) target = $region24
      $region23: #{tpu_custom_call.1} parent=5 // pred_region
        // Predicated region
        $region25: #{tpu_custom_call.1} parent=23 // pred_check
          %p174 = pneg %p47
        $region26: #{tpu_custom_call.1} parent=23 // pred_check_branch
          %176 = sbr.rel (%p174) target = $region28
        $region27: #{tpu_custom_call.1} parent=23 // pred_region
          %s177 = smul.u32 8, %s21
          %p178 = scmp.lt.s32.totalorder %s20, 1
          %s179 = scalar_select %p178, %s20, 1
          %p180 = scmp.lt.s32.totalorder %s177, 31
          %s181 = scalar_select %p180, %s177, 31
          %s182 = smul.addr %s179, 32
          %s183 = sadd.s32 %s181, %s182
          %s184 = smul.addr %s183, 8
          %s185 = scalar_lea.vmem %s0, %s184
          %s186 = smul.u32 8, %s21
        $region28: #{tpu_custom_call.1} parent=23 // pred_fallthru
          _
        // Predicated region
        $region29: #{tpu_custom_call.1} parent=23 // pred_check
          %p187 = pneg %p75
        $region30: #{tpu_custom_call.1} parent=23 // pred_check_branch
          %189 = sbr.rel (%p187) target = $region32
        $region31: #{tpu_custom_call.1} parent=23 // pred_region
          %s190 = smul.u32 8, %s21
          %p191 = scmp.lt.s32.totalorder %s20, 1
          %s192 = scalar_select %p191, %s20, 1
          %p193 = scmp.lt.s32.totalorder %s190, 31
          %s194 = scalar_select %p193, %s190, 31
          %s195 = smul.addr %s192, 32
          %s196 = sadd.s32 %s194, %s195
          %s197 = smul.addr %s196, 8
          %s198 = scalar_lea.vmem %s1, %s197
          %s199 = smul.u32 8, %s21
        $region32: #{tpu_custom_call.1} parent=23 // pred_fallthru
          _
      $region24: #{tpu_custom_call.1} parent=5 // pred_fallthru
        _
      %p200 = scmp.le.s32.totalorder 1, %s13
      %p201 = scmp.lt.s32.totalorder %s13, 9
      %p202 = pnand %p200, %p201
      %p203 = pneg %p202
      // Predicated region
      $region33: #{tpu_custom_call.1} parent=5 // pred_check
        _
      $region34: #{tpu_custom_call.1} parent=5 // pred_check_branch
        %205 = sbr.rel (%p202) target = $region36
      $region35: #{tpu_custom_call.1} parent=5 // pred_region
        %s206 = ssub.s32 %s13, 1
        %s207 = smul.u32 8, %s23
        %p208 = scmp.lt.s32.totalorder %s22, 1
        %s209 = scalar_select %p208, %s22, 1
        %p210 = scmp.lt.s32.totalorder %s207, 31
        %s211 = scalar_select %p210, %s207, 31
        %s212 = smul.addr %s209, 32
        %s213 = sadd.s32 %s211, %s212
        %s214 = smul.addr %s213, 8
        %s215 = scalar_lea.vmem %s0, %s214
        %p216 = pneg %p53
        %p217 = pneg %p50
        %s218 = smul.u32 8, %s23
        %p219 = scmp.lt.s32.totalorder %s22, 1
        %s220 = scalar_select %p219, %s22, 1
        %p221 = scmp.lt.s32.totalorder %s218, 31
        %s222 = scalar_select %p221, %s218, 31
        %s223 = smul.addr %s220, 32
        %s224 = sadd.s32 %s222, %s223
        %s225 = smul.addr %s224, 8
        %s226 = scalar_lea.vmem %s1, %s225
        %p227 = pneg %p81
        %p228 = pneg %p78
        %p229 = pneg %p102
        %p230 = pneg %p99
        %p231 = pneg %p123
        %p232 = pneg %p120
        %p233 = pneg %p149
        %p234 = pneg %p146
        %s235 = sand.u32 %s136, 1
        %s236 = scalar_lea.sflag [#allocation3], %s235
        %s237 = sand.u32 %s136, 1
        %s238 = smul.addr %s237, 4
        %s239 = scalar_lea.vmem [#allocation2], %s238
        %s240 = smul.u32 8, %s23
        %p241 = scmp.lt.s32.totalorder %s22, 1
        %s242 = scalar_select %p241, %s22, 1
        %p243 = scmp.lt.s32.totalorder %s240, 31
        %s244 = scalar_select %p243, %s240, 31
        %s245 = smul.addr %s242, 32
        %s246 = sadd.s32 %s244, %s245
        %s247 = smul.addr %s246, 8
        %s248 = scalar_lea.vmem %s0, %s247
        %s249 = smul.u32 8, %s23
        %s250 = smul.u32 8, %s23
        %p251 = scmp.lt.s32.totalorder %s22, 1
        %s252 = scalar_select %p251, %s22, 1
        %p253 = scmp.lt.s32.totalorder %s250, 31
        %s254 = scalar_select %p253, %s250, 31
        %s255 = smul.addr %s252, 32
        %s256 = sadd.s32 %s254, %s255
        %s257 = smul.addr %s256, 8
        %s258 = scalar_lea.vmem %s1, %s257
        %s259 = smul.u32 8, %s23
        %p260 = scmp.eq.s32.totalorder %s23, 0
        // Predicated region
        $region37: #{tpu_custom_call.1} parent=35 // pred_check
          %p261 = pneg %p260
        $region38: #{tpu_custom_call.1} parent=35 // pred_check_branch
          %263 = sbr.rel (%p261) target = $region40
        $region39: #{tpu_custom_call.1} parent=35 // pred_region
          %vm264 = vcmask 27648
          %265 = vst.msk [vmem:[%s239] sm:$0xf] %vm264, 0.0
        $region40: #{tpu_custom_call.1} parent=35 // pred_fallthru
          _
        %v266 = vld [vmem:[%s248] sm:$0xff]
        %v267 = vld [vmem:[%s248 + $0x8] sm:$0xff]
        %v268 = vld [vmem:[%s248 + $0x10] sm:$0xff]
        %v269 = vld [vmem:[%s248 + $0x18] sm:$0xff]
        %v270 = vld [vmem:[%s248 + $0x20] sm:$0xff]
        %v271 = vld [vmem:[%s248 + $0x28] sm:$0xff]
        %v272 = vld [vmem:[%s248 + $0x30] sm:$0xff]
        %v273 = vld [vmem:[%s248 + $0x38] sm:$0xff]
        %v274 = vld [vmem:[%s258] sm:$0xff]
        %v275 = vld [vmem:[%s258 + $0x8] sm:$0xff]
        %v276 = vld [vmem:[%s258 + $0x10] sm:$0xff]
        %v277 = vld [vmem:[%s258 + $0x18] sm:$0xff]
        %v278 = vld [vmem:[%s258 + $0x20] sm:$0xff]
        %v279 = vld [vmem:[%s258 + $0x28] sm:$0xff]
        %v280 = vld [vmem:[%s258 + $0x30] sm:$0xff]
        %v281 = vld [vmem:[%s258 + $0x38] sm:$0xff]
        %v282 = vld [vmem:[%s2] sm:$0xff]
        %v283 = vld [vmem:[%s2 + $0x8] sm:$0xff]
        %v284 = vld [vmem:[%s2 + $0x10] sm:$0xff]
        %v285 = vld [vmem:[%s2 + $0x18] sm:$0xff]
        %v286 = vld [vmem:[%s3] sm:$0x1]
        %v288 = vlaneseq
        %v289 = vshrl.u32 %v288, 7
        %v290 = vsub.s32 0, %v289
        %v291 = vrot.slane %v286, %v290
        %vm293 = vcmask 261120
        %v295 = vsel %vm293, %v266, 0
        %v298 = vsel %vm293, %v267, 0
        %v301 = vsel %vm293, %v268, 0
        %v304 = vsel %vm293, %v269, 0
        %v307 = vsel %vm293, %v270, 0
        %v310 = vsel %vm293, %v271, 0
        %v313 = vsel %vm293, %v272, 0
        %v316 = vsel %vm293, %v273, 0
        %318 = vmatprep.subr.mxu0 0.0
        %319 = vmatpush1.msra.mxu0 0.0
        %320 = vmatprep.subr.mxu0 0.0
        %321 = vmatpush1.msra.mxu0 0.0
        %322 = vmatprep.subr.mxu0 0.0
        %323 = vmatpush1.msra.mxu0 0.0
        %324 = vmatprep.subr.mxu0 0.0
        %325 = vmatpush1.msra.mxu0 0.0
        %326 = vmatprep.subr.mxu0 0.0
        %327 = vmatpush1.msra.mxu0 0.0
        %328 = vmatprep.subr.mxu0 0.0
        %329 = vmatpush1.msra.mxu0 0.0
        %330 = vmatprep.subr.mxu0 0.0
        %331 = vmatpush1.msra.mxu0 0.0
        %332 = vmatprep.subr.mxu0 0.0
        %333 = vmatpush1.msra.mxu0 0.0
        %334 = vmatprep.subr.mxu0 0.0
        %335 = vmatpush1.msra.mxu0 0.0
        %336 = vmatprep.subr.mxu0 0.0
        %337 = vmatpush1.msra.mxu0 0.0
        %338 = vmatprep.subr.mxu0 0.0
        %339 = vmatpush1.msra.mxu0 0.0
        %340 = vmatprep.subr.mxu0 0.0
        %341 = vmatpush1.msra.mxu0 0.0
        %342 = vmatprep.subr.mxu0 0.0
        %343 = vmatpush1.msra.mxu0 %v285
        %344 = vmatprep.subr.mxu0 0.0
        %345 = vmatpush1.msra.mxu0 %v284
        %346 = vmatprep.subr.mxu0 0.0
        %347 = vmatpush1.msra.mxu0 %v283
        %348 = vmatprep.subr.mxu0 0.0
        %349 = vmatpush1.msra.mxu0 %v282
        %350 = vmatprep.subr.mxu0 0.0
        %351 = vmatpush2.msra.mxu0 0.0
        %352 = vmatprep.subr.mxu0 0.0
        %353 = vmatpush2.msra.mxu0 0.0
        %354 = vmatprep.subr.mxu0 0.0
        %355 = vmatpush2.msra.mxu0 0.0
        %356 = vmatprep.subr.mxu0 0.0
        %357 = vmatpush2.msra.mxu0 0.0
        %358 = vmatprep.subr.mxu0 0.0
        %359 = vmatpush2.msra.mxu0 0.0
        %360 = vmatprep.subr.mxu0 0.0
        %361 = vmatpush2.msra.mxu0 0.0
        %362 = vmatprep.subr.mxu0 0.0
        %363 = vmatpush2.msra.mxu0 0.0
        %364 = vmatprep.subr.mxu0 0.0
        %365 = vmatpush2.msra.mxu0 0.0
        %366 = vmatprep.subr.mxu0 0.0
        %367 = vmatpush2.msra.mxu0 0.0
        %368 = vmatprep.subr.mxu0 0.0
        %369 = vmatpush2.msra.mxu0 0.0
        %370 = vmatprep.subr.mxu0 0.0
        %371 = vmatpush2.msra.mxu0 0.0
        %372 = vmatprep.subr.mxu0 0.0
        %373 = vmatpush2.msra.mxu0 0.0
        %374 = vmatprep.subr.mxu0 0.0
        %375 = vmatpush2.msra.mxu0 0.0
        %376 = vmatprep.subr.mxu0 0.0
        %377 = vmatpush2.msra.mxu0 0.0
        %378 = vmatprep.subr.mxu0 0.0
        %379 = vmatpush2.msra.mxu0 0.0
        %380 = vmatprep.subr.mxu0 0.0
        %381 = vmatpush2.msra.mxu0 0.0
        %382 = vmatprep.mubr.f32.mxu0 0.0
        %383 = vmatmul.mubr.f32.gmra.mxu0 %v295
        %v384 = vpop.f32.mrf.mxu0
        %v385 = vadd.f32 %v291, %v384
        %v386 = vpop.f32.mrf.mxu0
        %387 = vmatprep.mubr.f32.mxu0 0.0
        %388 = vmatmul.mubr.f32.gmra.mxu0 %v298
        %v389 = vpop.f32.mrf.mxu0
        %v390 = vadd.f32 %v291, %v389
        %v391 = vpop.f32.mrf.mxu0
        %392 = vmatprep.mubr.f32.mxu0 0.0
        %393 = vmatmul.mubr.f32.gmra.mxu0 %v301
        %v394 = vpop.f32.mrf.mxu0
        %v395 = vadd.f32 %v291, %v394
        %v396 = vpop.f32.mrf.mxu0
        %397 = vmatprep.mubr.f32.mxu0 0.0
        %398 = vmatmul.mubr.f32.gmra.mxu0 %v304
        %v399 = vpop.f32.mrf.mxu0
        %v400 = vadd.f32 %v291, %v399
        %v401 = vpop.f32.mrf.mxu0
        %402 = vmatprep.mubr.f32.mxu0 0.0
        %403 = vmatmul.mubr.f32.gmra.mxu0 %v307
        %v404 = vpop.f32.mrf.mxu0
        %v405 = vadd.f32 %v291, %v404
        %v406 = vpop.f32.mrf.mxu0
        %407 = vmatprep.mubr.f32.mxu0 0.0
        %408 = vmatmul.mubr.f32.gmra.mxu0 %v310
        %v409 = vpop.f32.mrf.mxu0
        %v410 = vadd.f32 %v291, %v409
        %v411 = vpop.f32.mrf.mxu0
        %412 = vmatprep.mubr.f32.mxu0 0.0
        %413 = vmatmul.mubr.f32.gmra.mxu0 %v313
        %v414 = vpop.f32.mrf.mxu0
        %v415 = vadd.f32 %v291, %v414
        %v416 = vpop.f32.mrf.mxu0
        %417 = vmatprep.mubr.f32.mxu0 0.0
        %418 = vmatmul.mubr.f32.gmra.mxu0 %v316
        %v419 = vpop.f32.mrf.mxu0
        %v420 = vadd.f32 %v291, %v419
        %v421 = vpop.f32.mrf.mxu0
        %422 = vdwg.mxu0
        %v423 = vld [vmem:[%s239] sm:$0xf]
        %424 = vxpose.xlu0.b32.start [1/16] %v385, 128
        %425 = vxpose.xlu0.b32.cont [2/16] %v390, 128
        %426 = vxpose.xlu0.b32.cont [3/16] %v395, 128
        %427 = vxpose.xlu0.b32.cont [4/16] %v400, 128
        %428 = vxpose.xlu0.b32.cont [5/16] %v405, 128
        %429 = vxpose.xlu0.b32.cont [6/16] %v410, 128
        %430 = vxpose.xlu0.b32.cont [7/16] %v415, 128
        %431 = vxpose.xlu0.b32.cont [8/16] %v420, 128
        %432 = vxpose.xlu0.b32.cont [9/16] 0.0, 128
        %433 = vxpose.xlu0.b32.cont [10/16] 0.0, 128
        %434 = vxpose.xlu0.b32.cont [11/16] 0.0, 128
        %435 = vxpose.xlu0.b32.cont [12/16] 0.0, 128
        %436 = vxpose.xlu0.b32.cont [13/16] 0.0, 128
        %437 = vxpose.xlu0.b32.cont [14/16] 0.0, 128
        %438 = vxpose.xlu0.b32.cont [15/16] 0.0, 128
        %439 = vxpose.xlu0.b32.end [16/16] 0.0, 128
        %v440 = vpop.trf.xlu0
        %v441 = vpop.trf.xlu0
        %v442 = vpop.trf.xlu0
        %v443 = vpop.trf.xlu0
        %v444 = vpop.trf.xlu0
        %v445 = vpop.trf.xlu0
        %v446 = vpop.trf.xlu0
        %v447 = vpop.trf.xlu0
        %v448 = vpop.trf.xlu0
        %v449 = vpop.trf.xlu0
        %v450 = vpop.trf.xlu0
        %v451 = vpop.trf.xlu0
        %v452 = vpop.trf.xlu0
        %v453 = vpop.trf.xlu0
        %v454 = vpop.trf.xlu0
        %v455 = vpop.trf.xlu0
        %vm456 = vcmask 523264
        %v458 = vsel %vm456, %v440, 0
        %460 = vmatprep.subr.mxu0 0.0
        %461 = vmatpush1.msra.mxu0 0.0
        %462 = vmatprep.subr.mxu0 0.0
        %463 = vmatpush1.msra.mxu0 0.0
        %464 = vmatprep.subr.mxu0 0.0
        %465 = vmatpush1.msra.mxu0 0.0
        %466 = vmatprep.subr.mxu0 0.0
        %467 = vmatpush1.msra.mxu0 0.0
        %468 = vmatprep.subr.mxu0 0.0
        %469 = vmatpush1.msra.mxu0 0.0
        %470 = vmatprep.subr.mxu0 0.0
        %471 = vmatpush1.msra.mxu0 0.0
        %472 = vmatprep.subr.mxu0 0.0
        %473 = vmatpush1.msra.mxu0 0.0
        %474 = vmatprep.subr.mxu0 0.0
        %475 = vmatpush1.msra.mxu0 0.0
        %476 = vmatprep.subr.mxu0 0.0
        %477 = vmatpush1.msra.mxu0 %v281
        %478 = vmatprep.subr.mxu0 0.0
        %479 = vmatpush1.msra.mxu0 %v280
        %480 = vmatprep.subr.mxu0 0.0
        %481 = vmatpush1.msra.mxu0 %v279
        %482 = vmatprep.subr.mxu0 0.0
        %483 = vmatpush1.msra.mxu0 %v278
        %484 = vmatprep.subr.mxu0 0.0
        %485 = vmatpush1.msra.mxu0 %v277
        %486 = vmatprep.subr.mxu0 0.0
        %487 = vmatpush1.msra.mxu0 %v276
        %488 = vmatprep.subr.mxu0 0.0
        %489 = vmatpush1.msra.mxu0 %v275
        %490 = vmatprep.subr.mxu0 0.0
        %491 = vmatpush1.msra.mxu0 %v274
        %492 = vmatprep.subr.mxu0 0.0
        %493 = vmatpush2.msra.mxu0 0.0
        %494 = vmatprep.subr.mxu0 0.0
        %495 = vmatpush2.msra.mxu0 0.0
        %496 = vmatprep.subr.mxu0 0.0
        %497 = vmatpush2.msra.mxu0 0.0
        %498 = vmatprep.subr.mxu0 0.0
        %499 = vmatpush2.msra.mxu0 0.0
        %500 = vmatprep.subr.mxu0 0.0
        %501 = vmatpush2.msra.mxu0 0.0
        %502 = vmatprep.subr.mxu0 0.0
        %503 = vmatpush2.msra.mxu0 0.0
        %504 = vmatprep.subr.mxu0 0.0
        %505 = vmatpush2.msra.mxu0 0.0
        %506 = vmatprep.subr.mxu0 0.0
        %507 = vmatpush2.msra.mxu0 0.0
        %508 = vmatprep.subr.mxu0 0.0
        %509 = vmatpush2.msra.mxu0 0.0
        %510 = vmatprep.subr.mxu0 0.0
        %511 = vmatpush2.msra.mxu0 0.0
        %512 = vmatprep.subr.mxu0 0.0
        %513 = vmatpush2.msra.mxu0 0.0
        %514 = vmatprep.subr.mxu0 0.0
        %515 = vmatpush2.msra.mxu0 0.0
        %516 = vmatprep.subr.mxu0 0.0
        %517 = vmatpush2.msra.mxu0 0.0
        %518 = vmatprep.subr.mxu0 0.0
        %519 = vmatpush2.msra.mxu0 0.0
        %520 = vmatprep.subr.mxu0 0.0
        %521 = vmatpush2.msra.mxu0 0.0
        %522 = vmatprep.subr.mxu0 0.0
        %523 = vmatpush2.msra.mxu0 0.0
        %524 = vmatprep.mubr.f32.mxu0 0.0
        %525 = vmatmul.mubr.f32.gmra.mxu0 %v458
        %v526 = vpop.f32.mrf.mxu0
        %v527 = vadd.f32 0.0, %v526
        %v528 = vpop.f32.mrf.mxu0
        %529 = vdwg.mxu0
        %v530 = vadd.f32 %v423, %v527
        %vm531 = vcmask 27648
        %532 = vst.msk [vmem:[%s239] sm:$0xf] %vm531, %v530
        %p533 = scmp.eq.s32.totalorder %s23, 3
        // Predicated region
        $region41: #{tpu_custom_call.1} parent=35 // pred_check
          %p534 = pneg %p533
        $region42: #{tpu_custom_call.1} parent=35 // pred_check_branch
          %536 = sbr.rel (%p534) target = $region44
        $region43: #{tpu_custom_call.1} parent=35 // pred_region
          %v537 = vld [vmem:[%s239] sm:$0xf]
          %v538 = vsel %vm531, %v537, -inf
          %539 = vmax.xlane.f32.xlu0 %v538
          %v540 = vpop.xlane.xlu0 %539
          %v541 = vsub.f32 %v537, %v540
          %v542 = vmul.f32 %v541, 1.442695
          %v543 = vpow.pop %v542
          %v544 = vsel %vm531, %v543, 0.0
          %545 = vadd.xlane.f32.xlu0 %v544
          %v546 = vpop.xlane.xlu0 %545
          %v547 = vrcp.pop %v546
          %v548 = vmul.f32 %v543, %v547
          %549 = vst.msk [vmem:[%s239] sm:$0xf] %vm531, %v548
        $region44: #{tpu_custom_call.1} parent=35 // pred_fallthru
          _
        %s550 = sand.u32 %s136, 1
        %s551 = scalar_lea.sflag [#allocation3], %s550
        %s552 = sand.u32 %s136, 1
        %s553 = smul.addr %s552, 4
        %s554 = scalar_lea.vmem [#allocation2], %s553
        // Predicated region
        $region45: #{tpu_custom_call.1} parent=35 // pred_check
          %p555 = pneg %p146
        $region46: #{tpu_custom_call.1} parent=35 // pred_check_branch
          %557 = sbr.rel (%p555) target = $region48
        $region47: #{tpu_custom_call.1} parent=35 // pred_region
          %s559 = ssub.s32 64, 64
          %560 = vsyncadd %s551, %s559
          %s561 = smul.addr %s22, 64
          %s562 = scalar_lea.hbm %s4, %s561
          %s564 = sshll.u32 %s554, 4
          %s565 = int_to_ptr.vmem [resolvable:$true] %s564
          %567 = dma.vmem_to_hbm [thread:$0]  %s565, 64, %s562, %s551
        $region48: #{tpu_custom_call.1} parent=35 // pred_fallthru
          _
      $region36: #{tpu_custom_call.1} parent=5 // pred_fallthru
        _
      %p568 = scmp.le.s32.totalorder 2, %s13
      // Predicated region
      $region49: #{tpu_custom_call.1} parent=5 // pred_check
        %p569 = pneg %p568
      $region50: #{tpu_custom_call.1} parent=5 // pred_check_branch
        %571 = sbr.rel (%p569) target = $region52
      $region51: #{tpu_custom_call.1} parent=5 // pred_region
        %s572 = ssub.s32 %s13, 2
        // Predicated region
        $region53: #{tpu_custom_call.1} parent=51 // pred_check
          %p573 = pneg %p152
        $region54: #{tpu_custom_call.1} parent=51 // pred_check_branch
          %575 = sbr.rel (%p573) target = $region56
        $region55: #{tpu_custom_call.1} parent=51 // pred_region
          %s576 = sand.u32 %s137, 1
          %s577 = scalar_lea.sflag [#allocation3], %s576
          %s578 = sand.u32 %s137, 1
          %s579 = smul.addr %s578, 4
          %s580 = scalar_lea.vmem [#allocation2], %s579
          %581 = dma.done %s577, 64
        $region56: #{tpu_custom_call.1} parent=51 // pred_fallthru
          _
      $region52: #{tpu_custom_call.1} parent=5 // pred_fallthru
        _
    $region6: #{tpu_custom_call.1} parent=1 // loop_footer
      %s17 = sadd.s32 1, %s13
    $region7: #{tpu_custom_call.1} parent=1 // loop_footer_branch
      %12 = sbr.rel target = $region3
    $region8: #{tpu_custom_call.1} parent=1 // loop_exit
      _
    %582 = vsyncpa [#allocation3], 1
    %s583 = scalar_lea.sflag [#allocation3], 1
    %584 = vsyncpa %s583, 1

</llo_original>
